<compile_context>
chip_gen: v7x
topology: tpu7x:2x2x1
jax: 0.10.0
libtpu: 0.0.40
codegen_flags: <defaults>
</compile_context>

<pallas_src>
import functools

import jax
import jax.numpy as jnp
from jax.experimental import pallas as pl
from jax.experimental.pallas import tpu as pltpu

HIDDEN = 128


def _round_up(x, m):
    return ((x + m - 1) // m) * m


def _choose_tm(B):
    """Batch tile: >=16 rows (bf16 sublane packing), >=2 grid steps once
    B >= 32 (v7x dual TensorCore), capped at 512 (~85% HBM roofline)."""
    if B < 32:
        return max(16, _round_up(B, 16))
    return min(512, _round_up(pl.cdiv(B, 2), 16))


def dqn_kernel(x_ref, w1_ref, b1_ref, w2_ref, b2_ref, w3_ref, b3_ref,
               q_ref, act_ref, *, n_actions):
    # Layer 1: Linear(n_obs_pad -> 128) + ReLU   (bf16 MXU, f32 accumulate)
    h1 = jnp.dot(x_ref[...], w1_ref[...], preferred_element_type=jnp.float32)
    h1 = jnp.maximum(h1 + b1_ref[...], 0.0)
    # Layer 2: Linear(128 -> 128) + ReLU
    h2 = jnp.dot(h1.astype(jnp.bfloat16), w2_ref[...],
                 preferred_element_type=jnp.float32)
    h2 = jnp.maximum(h2 + b2_ref[...], 0.0)
    # Layer 3: Linear(128 -> 128-padded actions)
    q = jnp.dot(h2.astype(jnp.bfloat16), w3_ref[...],
                preferred_element_type=jnp.float32) + b3_ref[...]

    # Lane-dense bf16 store of the Q slab (halved writeback vs f32).
    q_ref[...] = q.astype(q_ref.dtype)

    # Fused greedy action: masked argmax over the real action lanes (padded
    # columns are excluded), implemented as max + first-index-of-max so it
    # lowers to plain XLU reductions.
    lane = jax.lax.broadcasted_iota(jnp.int32, q.shape, 1)
    valid = lane < n_actions
    masked = jnp.where(valid, q, -jnp.inf)
    row_max = jnp.max(masked, axis=1, keepdims=True)
    is_max = (masked == row_max) & valid
    act_ref[...] = jnp.min(jnp.where(is_max, lane, q.shape[1]),
                           axis=1, keepdims=True).astype(jnp.int32)


def _dqn_forward_impl(x, packed, n_actions):
    w1, b1 = packed["w1"], packed["b1"]
    w2, b2 = packed["w2"], packed["b2"]
    w3, b3 = packed["w3"], packed["b3"]

    B, n_obs = x.shape
    KP = w1.shape[0]          # padded observation dim (multiple of 8)
    H = w1.shape[1]           # 128
    OP = w3.shape[1]          # padded action dim (multiple of 128)

    TM = _choose_tm(B)
    B_pad = _round_up(B, TM)

    # Pad batch + feature dims, cast to bf16 for the MXU (fused under jit).
    xp = jnp.zeros((B_pad, KP), jnp.bfloat16)
    xp = xp.at[:B, :n_obs].set(x.astype(jnp.bfloat16))

    grid = (pl.cdiv(B_pad, TM),)
    q_pad, act_pad = pl.pallas_call(
        functools.partial(dqn_kernel, n_actions=n_actions),
        out_shape=(jax.ShapeDtypeStruct((B_pad, OP), jnp.bfloat16),
                   jax.ShapeDtypeStruct((B_pad, 1), jnp.int32)),
        grid=grid,
        in_specs=[
            pl.BlockSpec((TM, KP), lambda i: (i, 0)),   # x: tiled over batch
            pl.BlockSpec((KP, H), lambda i: (0, 0)),    # weights: VMEM-resident
            pl.BlockSpec((1, H), lambda i: (0, 0)),
            pl.BlockSpec((H, H), lambda i: (0, 0)),
            pl.BlockSpec((1, H), lambda i: (0, 0)),
            pl.BlockSpec((H, OP), lambda i: (0, 0)),
            pl.BlockSpec((1, OP), lambda i: (0, 0)),
        ],
        out_specs=(pl.BlockSpec((TM, OP), lambda i: (i, 0)),
                   pl.BlockSpec((TM, 1), lambda i: (i, 0))),
        compiler_params=pltpu.CompilerParams(
            dimension_semantics=("parallel",)),
    )(xp, w1, b1, w2, b2, w3, b3)

    # Drop batch padding / padded action columns; Q back to f32 for consumers.
    q = q_pad[:B, :n_actions].astype(jnp.float32)
    greedy = act_pad[:B, 0]
    return q, greedy


# One dispatch for pad + kernel + slice (n_actions is static).
dqn_forward = jax.jit(_dqn_forward_impl, static_argnums=(2,))


def init_params(key, n_observations, n_actions, hidden=HIDDEN):
    """Reference f32 params (PyTorch-Linear-like uniform fan-in init),
    stored as (in_features, out_features) so forward is x @ W + b."""
    ks = jax.random.split(key, 6)

    def lin(kw, kb, fan_in, fan_out):
        bound = 1.0 / jnp.sqrt(fan_in)
        w = jax.random.uniform(kw, (fan_in, fan_out), jnp.float32, -bound, bound)
        b = jax.random.uniform(kb, (1, fan_out), jnp.float32, -bound, bound)
        return w, b

    w1, b1 = lin(ks[0], ks[1], n_observations, hidden)
    w2, b2 = lin(ks[2], ks[3], hidden, hidden)
    w3, b3 = lin(ks[4], ks[5], hidden, n_actions)
    return {"w1": w1, "b1": b1, "w2": w2, "b2": b2, "w3": w3, "b3": b3}


def pack_params(params, n_observations, n_actions, hidden=HIDDEN):
    """Pad w1 rows to a sublane multiple and w3/b3 columns to 128 (lane-dense),
    cast weights to bf16 (biases stay f32). Padded action columns are masked
    off inside the kernel's argmax and sliced away from the Q output."""
    KP = _round_up(max(n_observations, 1), 8)
    OP = _round_up(max(n_actions, 1), 128)

    w1 = jnp.zeros((KP, hidden), jnp.float32).at[:n_observations, :].set(
        params["w1"]).astype(jnp.bfloat16)
    w2 = params["w2"].astype(jnp.bfloat16)
    w3 = jnp.zeros((hidden, OP), jnp.float32).at[:, :n_actions].set(
        params["w3"]).astype(jnp.bfloat16)
    b3 = jnp.zeros((1, OP), jnp.float32).at[:, :n_actions].set(params["b3"])

    return {"w1": w1, "b1": params["b1"], "w2": w2, "b2": params["b2"],
            "w3": w3, "b3": b3}


def dqn_reference(x, params):
    h1 = jnp.maximum(x @ params["w1"] + params["b1"], 0.0)
    h2 = jnp.maximum(h1 @ params["w2"] + params["b2"], 0.0)
    return h2 @ params["w3"] + params["b3"]


if __name__ == "__main__":
    # CartPole / Flappy-Bird-style shapes: tiny observation vector, few actions.
    batch = 8
    n_observations = 4
    n_actions = 2

    key = jax.random.PRNGKey(0)
    k_param, k_x = jax.random.split(key)
    params = init_params(k_param, n_observations, n_actions)
    packed = pack_params(params, n_observations, n_actions)
    x = jax.random.normal(k_x, (batch, n_observations), dtype=jnp.float32)

    q, greedy = dqn_forward(x, packed, n_actions)
    q = jax.block_until_ready(q)
    greedy = jax.block_until_ready(greedy)

    ref = dqn_reference(x, params)
    assert q.shape == (batch, n_actions)
    # bf16 MXU inputs + bf16 Q store with f32 accumulation -> relaxed tolerance.
    assert jnp.allclose(q, ref, atol=3e-2, rtol=3e-2), "Q mismatch vs reference"

    # Fused greedy action (the deterministic branch of act()).
    assert greedy.shape == (batch,)
    assert bool(jnp.all((greedy >= 0) & (greedy < n_actions)))
    # Where the reference Q-gap is clearly larger than bf16 error, the fused
    # argmax must agree with the f32 reference argmax.
    ref_sorted = jnp.sort(ref, axis=1)
    confident = (ref_sorted[:, -1] - ref_sorted[:, -2]) > 5e-2
    ref_greedy = jnp.argmax(ref, axis=1)
    assert bool(jnp.all(jnp.where(confident, greedy == ref_greedy, True)))

    # Also exercise a larger batch (multi-step grid / dual-TC path).
    big_x = jax.random.normal(k_x, (300, n_observations), dtype=jnp.float32)
    big_q, big_a = dqn_forward(big_x, packed, n_actions)
    big_q = jax.block_until_ready(big_q)
    big_ref = dqn_reference(big_x, params)
    assert big_q.shape == (300, n_actions) and big_a.shape == (300,)
    assert jnp.allclose(big_q, big_ref, atol=3e-2, rtol=3e-2)

    # TODO(synk): act()'s epsilon-greedy branch uses host-side RNG / Python
    # control flow; that policy glue stays outside the kernel (the fused
    # greedy-argmax output covers the deterministic branch).
    print("KERNEL_OK")
</pallas_src>

<mosaic_0001>
module attributes {stable_mosaic.version = 11 : i64} {
  func.func @dqn_kernel(%arg0: i32, %arg1: memref<16x8xbf16, #tpu.memory_space<vmem>>, %arg2: memref<8x128xbf16, #tpu.memory_space<vmem>>, %arg3: memref<1x128xf32, #tpu.memory_space<vmem>>, %arg4: memref<128x128xbf16, #tpu.memory_space<vmem>>, %arg5: memref<1x128xf32, #tpu.memory_space<vmem>>, %arg6: memref<128x128xbf16, #tpu.memory_space<vmem>>, %arg7: memref<1x128xf32, #tpu.memory_space<vmem>>, %arg8: memref<16x128xbf16, #tpu.memory_space<vmem>>, %arg9: memref<16x1xi32, #tpu.memory_space<vmem>>) attributes {dimension_semantics = [#tpu.dimension_semantics<parallel>], iteration_bounds = array<i64: 1>, scalar_prefetch = 0 : i64, scratch_operands = 0 : i64, tpu.core_type = #tpu.core_type<tc>, window_params = [{transform_indices = @transform_0, window_bounds = array<i64: 16, 8>}, {pipeline_mode = #tpu.pipeline_mode<synchronous>, transform_indices = @transform_1, window_bounds = array<i64: 8, 128>}, {pipeline_mode = #tpu.pipeline_mode<synchronous>, transform_indices = @transform_2, window_bounds = array<i64: 1, 128>}, {pipeline_mode = #tpu.pipeline_mode<synchronous>, transform_indices = @transform_3, window_bounds = array<i64: 128, 128>}, {pipeline_mode = #tpu.pipeline_mode<synchronous>, transform_indices = @transform_4, window_bounds = array<i64: 1, 128>}, {pipeline_mode = #tpu.pipeline_mode<synchronous>, transform_indices = @transform_5, window_bounds = array<i64: 128, 128>}, {pipeline_mode = #tpu.pipeline_mode<synchronous>, transform_indices = @transform_6, window_bounds = array<i64: 1, 128>}, {transform_indices = @transform_7, window_bounds = array<i64: 16, 128>}, {transform_indices = @transform_8, window_bounds = array<i64: 16, 1>}]} {
    %c0 = arith.constant 0 : index
    %c0_0 = arith.constant 0 : index
    %0 = vector.load %arg1[%c0, %c0_0] : memref<16x8xbf16, #tpu.memory_space<vmem>>, vector<16x8xbf16>
    %c0_1 = arith.constant 0 : index
    %c0_2 = arith.constant 0 : index
    %1 = vector.load %arg2[%c0_1, %c0_2] : memref<8x128xbf16, #tpu.memory_space<vmem>>, vector<8x128xbf16>
    %cst = arith.constant dense<0.000000e+00> : vector<16x128xf32>
    %2 = tpu.matmul %0, %1, %cst {dimension_numbers = #tpu.dot_dimension_numbers<[1], [0], [0], [1], [0, 0, 1, 1], [], []>} : vector<16x8xbf16>, vector<8x128xbf16>, vector<16x128xf32> -> vector<16x128xf32>
    %c0_3 = arith.constant 0 : index
    %c0_4 = arith.constant 0 : index
    %3 = vector.load %arg3[%c0_3, %c0_4] : memref<1x128xf32, #tpu.memory_space<vmem>>, vector<1x128xf32>
    %4 = vector.broadcast %3 : vector<1x128xf32> to vector<16x128xf32>
    %5 = arith.addf %2, %4 : vector<16x128xf32>
    %cst_5 = arith.constant 0.000000e+00 : f32
    %6 = vector.broadcast %cst_5 : f32 to vector<16x128xf32>
    %7 = arith.maximumf %5, %6 : vector<16x128xf32>
    %8 = arith.truncf %7 : vector<16x128xf32> to vector<16x128xbf16>
    %c0_6 = arith.constant 0 : index
    %c0_7 = arith.constant 0 : index
    %9 = vector.load %arg4[%c0_6, %c0_7] : memref<128x128xbf16, #tpu.memory_space<vmem>>, vector<128x128xbf16>
    %cst_8 = arith.constant dense<0.000000e+00> : vector<16x128xf32>
    %10 = tpu.matmul %8, %9, %cst_8 {dimension_numbers = #tpu.dot_dimension_numbers<[1], [0], [0], [1], [0, 0, 1, 1], [], []>} : vector<16x128xbf16>, vector<128x128xbf16>, vector<16x128xf32> -> vector<16x128xf32>
    %c0_9 = arith.constant 0 : index
    %c0_10 = arith.constant 0 : index
    %11 = vector.load %arg5[%c0_9, %c0_10] : memref<1x128xf32, #tpu.memory_space<vmem>>, vector<1x128xf32>
    %12 = vector.broadcast %11 : vector<1x128xf32> to vector<16x128xf32>
    %13 = arith.addf %10, %12 : vector<16x128xf32>
    %cst_11 = arith.constant 0.000000e+00 : f32
    %14 = vector.broadcast %cst_11 : f32 to vector<16x128xf32>
    %15 = arith.maximumf %13, %14 : vector<16x128xf32>
    %16 = arith.truncf %15 : vector<16x128xf32> to vector<16x128xbf16>
    %c0_12 = arith.constant 0 : index
    %c0_13 = arith.constant 0 : index
    %17 = vector.load %arg6[%c0_12, %c0_13] : memref<128x128xbf16, #tpu.memory_space<vmem>>, vector<128x128xbf16>
    %cst_14 = arith.constant dense<0.000000e+00> : vector<16x128xf32>
    %18 = tpu.matmul %16, %17, %cst_14 {dimension_numbers = #tpu.dot_dimension_numbers<[1], [0], [0], [1], [0, 0, 1, 1], [], []>} : vector<16x128xbf16>, vector<128x128xbf16>, vector<16x128xf32> -> vector<16x128xf32>
    %c0_15 = arith.constant 0 : index
    %c0_16 = arith.constant 0 : index
    %19 = vector.load %arg7[%c0_15, %c0_16] : memref<1x128xf32, #tpu.memory_space<vmem>>, vector<1x128xf32>
    %20 = vector.broadcast %19 : vector<1x128xf32> to vector<16x128xf32>
    %21 = arith.addf %18, %20 : vector<16x128xf32>
    %22 = arith.truncf %21 : vector<16x128xf32> to vector<16x128xbf16>
    %c0_17 = arith.constant 0 : index
    %c0_18 = arith.constant 0 : index
    %23 = vector.load %arg8[%c0_17, %c0_18] : memref<16x128xbf16, #tpu.memory_space<vmem>>, vector<16x128xbf16>
    tpu.vector_store %arg8[%c0_17, %c0_18], %22 {strides = array<i32>} : memref<16x128xbf16, #tpu.memory_space<vmem>>, vector<16x128xbf16>,
    %24 = tpu.iota {dimensions = array<i32: 1>} : vector<16x128xi32>
    %c2_i32 = arith.constant 2 : i32
    %25 = vector.broadcast %c2_i32 : i32 to vector<16x128xi32>
    %26 = arith.cmpi slt, %24, %25 : vector<16x128xi32>
    %cst_19 = arith.constant 0xFF800000 : f32
    %27 = vector.broadcast %cst_19 : f32 to vector<16x128xf32>
    %28 = arith.select %26, %21, %27 : vector<16x128xi1>, vector<16x128xf32>
    %cst_20 = arith.constant dense<0xFF800000> : vector<16xf32>
    %29 = vector.multi_reduction <maximumf>, %28, %cst_20 [1] : vector<16x128xf32> to vector<16xf32>
    %30 = vector.shape_cast %29 : vector<16xf32> to vector<16x1xf32>
    %31 = vector.broadcast %30 : vector<16x1xf32> to vector<16x128xf32>
    %32 = arith.cmpf oeq, %28, %31 : vector<16x128xf32>
    %33 = arith.andi %32, %26 : vector<16x128xi1>
    %c128_i32 = arith.constant 128 : i32
    %34 = vector.broadcast %c128_i32 : i32 to vector<16x128xi32>
    %35 = arith.select %33, %24, %34 : vector<16x128xi1>, vector<16x128xi32>
    %cst_21 = arith.constant dense<2147483647> : vector<16xi32>
    %36 = vector.multi_reduction <minsi>, %35, %cst_21 [1] : vector<16x128xi32> to vector<16xi32>
    %37 = vector.shape_cast %36 : vector<16xi32> to vector<16x1xi32>
    %c0_22 = arith.constant 0 : index
    %c0_23 = arith.constant 0 : index
    %38 = vector.load %arg9[%c0_22, %c0_23] : memref<16x1xi32, #tpu.memory_space<vmem>>, vector<16x1xi32>
    tpu.vector_store %arg9[%c0_22, %c0_23], %37 {strides = array<i32>} : memref<16x1xi32, #tpu.memory_space<vmem>>, vector<16x1xi32>,
    return
  }
  func.func @transform_0(%arg0: i32) -> (i32, i32) {
    %c0_i32 = arith.constant 0 : i32
    %c0_i32_0 = arith.constant 0 : i32
    return %arg0, %c0_i32 : i32, i32
  }
  func.func @transform_1(%arg0: i32) -> (i32, i32) {
    %c0_i32 = arith.constant 0 : i32
    %c0_i32_0 = arith.constant 0 : i32
    %c0_i32_1 = arith.constant 0 : i32
    return %c0_i32, %c0_i32_0 : i32, i32
  }
  func.func @transform_2(%arg0: i32) -> (i32, i32) {
    %c0_i32 = arith.constant 0 : i32
    %c0_i32_0 = arith.constant 0 : i32
    %c0_i32_1 = arith.constant 0 : i32
    return %c0_i32, %c0_i32_0 : i32, i32
  }
  func.func @transform_3(%arg0: i32) -> (i32, i32) {
    %c0_i32 = arith.constant 0 : i32
    %c0_i32_0 = arith.constant 0 : i32
    %c0_i32_1 = arith.constant 0 : i32
    return %c0_i32, %c0_i32_0 : i32, i32
  }
  func.func @transform_4(%arg0: i32) -> (i32, i32) {
    %c0_i32 = arith.constant 0 : i32
    %c0_i32_0 = arith.constant 0 : i32
    %c0_i32_1 = arith.constant 0 : i32
    return %c0_i32, %c0_i32_0 : i32, i32
  }
  func.func @transform_5(%arg0: i32) -> (i32, i32) {
    %c0_i32 = arith.constant 0 : i32
    %c0_i32_0 = arith.constant 0 : i32
    %c0_i32_1 = arith.constant 0 : i32
    return %c0_i32, %c0_i32_0 : i32, i32
  }
  func.func @transform_6(%arg0: i32) -> (i32, i32) {
    %c0_i32 = arith.constant 0 : i32
    %c0_i32_0 = arith.constant 0 : i32
    %c0_i32_1 = arith.constant 0 : i32
    return %c0_i32, %c0_i32_0 : i32, i32
  }
  func.func @transform_7(%arg0: i32) -> (i32, i32) {
    %c0_i32 = arith.constant 0 : i32
    %c0_i32_0 = arith.constant 0 : i32
    return %arg0, %c0_i32 : i32, i32
  }
  func.func @transform_8(%arg0: i32) -> (i32, i32) {
    %c0_i32 = arith.constant 0 : i32
    %c0_i32_0 = arith.constant 0 : i32
    return %arg0, %c0_i32 : i32, i32
  }
}

</mosaic_0001>

<llo_original>
// kernel: _dqn_forward_impl.1
$region0: #{_dqn_forward_impl.1}
  #allocation0 [shape = 'u32[]', space=smem, size = 0x4, offset = 0x4, fixed_abs, tag = 'smem constant byte address 0x4 - core index']
  #allocation1 [shape = 'u32[144,128]{1,0:T(1,128)}', space=vmem, size = 0x12000, scoped, tag = 'internal scratch']
  %s0 = inlined_call_operand.vmem [shape: bf16[16,8], index: 0, kind: input, shape index: {}]
  %s1 = inlined_call_operand.vmem [shape: bf16[8,128], index: 1, kind: input, shape index: {}]
  %s2 = inlined_call_operand.vmem [shape: f32[1,128], index: 2, kind: input, shape index: {}]
  %s3 = inlined_call_operand.hbm [shape: bf16[128,128], index: 3, kind: input, shape index: {}]
  %s4 = inlined_call_operand.vmem [shape: f32[1,128], index: 4, kind: input, shape index: {}]
  %s5 = inlined_call_operand.hbm [shape: bf16[128,128], index: 5, kind: input, shape index: {}]
  %s6 = inlined_call_operand.vmem [shape: f32[1,128], index: 6, kind: input, shape index: {}]
  %s7 = inlined_call_operand.vmem [shape: bf16[16,128], index: 7, kind: output, shape index: {0}]
  %s8 = inlined_call_operand.vmem [shape: s32[16,1], index: 8, kind: output, shape index: {1}]
  %9 = xla_tuple %s7, %s8
  %s10 = sld [smem:[#allocation0]]
  $region54: #{_dqn_forward_impl.1} parent=0
    _
  %s12 = ssub.s32 1, %s10
  %s13 = scalar_select 0, %s12, %s10
  $region1: #{_dqn_forward_impl.1} parent=0
    #allocation2 [shape = 'u8[32768]{0}', space=vmem, size = 0x8000, scoped, tag = 'input window, operand 3, single buffered']
    #allocation3 [shape = 's32[1]{0}', space=sflag, size = 0x4, scoped, tag = 'scoped memory for _dqn_forward_impl.1']
    #allocation4 [shape = 'u8[32768]{0}', space=vmem, size = 0x8000, scoped, tag = 'input window, operand 5, single buffered']
    #allocation5 [shape = 's32[1]{0}', space=sflag, size = 0x4, scoped, tag = 'scoped memory for _dqn_forward_impl.1']
    %14 = vsyncpa [#allocation3], 0
    %15 = vsyncpa [#allocation5], 0
    // Predicated region
    $region2: #{_dqn_forward_impl.1} parent=1 // pred_check
      _
    $region3: #{_dqn_forward_impl.1} parent=1 // pred_check_branch
      %17 = sbr.rel (0) target = $region5
    $region4: #{_dqn_forward_impl.1} parent=1 // pred_region
      _
    $region5: #{_dqn_forward_impl.1} parent=1 // pred_fallthru
      _
    // Predicated region
    $region6: #{_dqn_forward_impl.1} parent=1 // pred_check
      _
    $region7: #{_dqn_forward_impl.1} parent=1 // pred_check_branch
      %19 = sbr.rel (0) target = $region9
    $region8: #{_dqn_forward_impl.1} parent=1 // pred_region
      _
    $region9: #{_dqn_forward_impl.1} parent=1 // pred_fallthru
      _
    // Predicated region
    $region10: #{_dqn_forward_impl.1} parent=1 // pred_check
      _
    $region11: #{_dqn_forward_impl.1} parent=1 // pred_check_branch
      %21 = sbr.rel (0) target = $region13
    $region12: #{_dqn_forward_impl.1} parent=1 // pred_region
      _
    $region13: #{_dqn_forward_impl.1} parent=1 // pred_fallthru
      _
    // Predicated region
    $region14: #{_dqn_forward_impl.1} parent=1 // pred_check
      _
    $region15: #{_dqn_forward_impl.1} parent=1 // pred_check_branch
      %23 = sbr.rel (0) target = $region17
    $region16: #{_dqn_forward_impl.1} parent=1 // pred_region
      %s25 = ssub.s32 1024, 1024
      %26 = vsyncadd [#allocation3], %s25
      %s27 = sshll.u32 [#allocation2], 4
      %s28 = int_to_ptr.vmem [resolvable:$true] %s27
      %33 = dma.hbm_to_vmem [thread:$0]  %s3, 1024, %s28, [#allocation3], 64, 64, 4
    $region17: #{_dqn_forward_impl.1} parent=1 // pred_fallthru
      _
    // Predicated region
    $region18: #{_dqn_forward_impl.1} parent=1 // pred_check
      _
    $region19: #{_dqn_forward_impl.1} parent=1 // pred_check_branch
      %35 = sbr.rel (0) target = $region21
    $region20: #{_dqn_forward_impl.1} parent=1 // pred_region
      _
    $region21: #{_dqn_forward_impl.1} parent=1 // pred_fallthru
      _
    // Predicated region
    $region22: #{_dqn_forward_impl.1} parent=1 // pred_check
      _
    $region23: #{_dqn_forward_impl.1} parent=1 // pred_check_branch
      %37 = sbr.rel (0) target = $region25
    $region24: #{_dqn_forward_impl.1} parent=1 // pred_region
      %s39 = ssub.s32 1024, 1024
      %40 = vsyncadd [#allocation5], %s39
      %s41 = sshll.u32 [#allocation4], 4
      %s42 = int_to_ptr.vmem [resolvable:$true] %s41
      %47 = dma.hbm_to_vmem [thread:$0]  %s5, 1024, %s42, [#allocation5], 64, 64, 4
    $region25: #{_dqn_forward_impl.1} parent=1 // pred_fallthru
      _
    // Predicated region
    $region26: #{_dqn_forward_impl.1} parent=1 // pred_check
      _
    $region27: #{_dqn_forward_impl.1} parent=1 // pred_check_branch
      %49 = sbr.rel (0) target = $region29
    $region28: #{_dqn_forward_impl.1} parent=1 // pred_region
      _
    $region29: #{_dqn_forward_impl.1} parent=1 // pred_fallthru
      _
    // Predicated region
    $region30: #{_dqn_forward_impl.1} parent=1 // pred_check
      _
    $region31: #{_dqn_forward_impl.1} parent=1 // pred_check_branch
      %51 = sbr.rel (0) target = $region33
    $region32: #{_dqn_forward_impl.1} parent=1 // pred_region
      %52 = dma.done [#allocation3], 1024
    $region33: #{_dqn_forward_impl.1} parent=1 // pred_fallthru
      _
    // Predicated region
    $region34: #{_dqn_forward_impl.1} parent=1 // pred_check
      _
    $region35: #{_dqn_forward_impl.1} parent=1 // pred_check_branch
      %54 = sbr.rel (0) target = $region37
    $region36: #{_dqn_forward_impl.1} parent=1 // pred_region
      %55 = dma.done [#allocation5], 1024
    $region37: #{_dqn_forward_impl.1} parent=1 // pred_fallthru
      _
    %v57 = vld [vmem:[%s0] sm:$0xf]
    %v58 = vld [vmem:[%s0 + $0x4] sm:$0xf]
    %v59 = vld [vmem:[%s1] sm:$0xf]
    %v60 = vld [vmem:[%s2] sm:$0x1]
    %v62 = vlaneseq
    %v63 = vshrl.u32 %v62, 7
    %v64 = vsub.s32 0, %v63
    %v65 = vrot.slane %v60, %v64
    %v69 = vunpack.c.l.b16 %v57
    %v70 = vunpack.c.l.b16 %v58
    %v71 = vpack.c.b16 %v70, %v69
    %vm72 = vcmask 64512
    %v74 = vsel %vm72, %v71, 0
    %vm76 = vcmask 1043456
    %v78 = vsel %vm76, %v59, 0
    %80 = vmatprep.subr.bf16.mxu0 0
    %81 = vmatpush1.bf16.msra.mxu0 %v78
    %82 = vmatprep.subr.bf16.mxu0 0
    %83 = vmatpush1.bf16.msra.mxu0 0
    %84 = vmatprep.subr.bf16.mxu0 0
    %85 = vmatpush1.bf16.msra.mxu0 0
    %86 = vmatprep.subr.bf16.mxu0 0
    %87 = vmatpush1.bf16.msra.mxu0 0
    %88 = vmatprep.subr.bf16.mxu0 0
    %89 = vmatpush1.bf16.msra.mxu0 0
    %90 = vmatprep.subr.bf16.mxu0 0
    %91 = vmatpush1.bf16.msra.mxu0 0
    %92 = vmatprep.subr.bf16.mxu0 0
    %93 = vmatpush1.bf16.msra.mxu0 0
    %94 = vmatprep.subr.bf16.mxu0 0
    %95 = vmatpush1.bf16.msra.mxu0 0
    %96 = vmatprep.subr.bf16.mxu0 0
    %97 = vmatpush1.bf16.msra.mxu0 0
    %98 = vmatprep.subr.bf16.mxu0 0
    %99 = vmatpush1.bf16.msra.mxu0 0
    %100 = vmatprep.subr.bf16.mxu0 0
    %101 = vmatpush1.bf16.msra.mxu0 0
    %102 = vmatprep.subr.bf16.mxu0 0
    %103 = vmatpush1.bf16.msra.mxu0 0
    %104 = vmatprep.subr.bf16.mxu0 0
    %105 = vmatpush1.bf16.msra.mxu0 0
    %106 = vmatprep.subr.bf16.mxu0 0
    %107 = vmatpush1.bf16.msra.mxu0 0
    %108 = vmatprep.subr.bf16.mxu0 0
    %109 = vmatpush1.bf16.msra.mxu0 0
    %110 = vmatprep.subr.bf16.mxu0 0
    %111 = vmatpush1.bf16.msra.mxu0 0
    %112 = vmatprep.mubr.bf16.mxu0 0
    %113 = vmatmul.mubr.bf16.gmra.mrb[0].mxu0 %v74
    %v114 = vpop.f32.mrb[0].mxu0
    %v115 = vadd.f32 %v65, %v114
    %v116 = vpop.f32.mrb[0].mxu0
    %v117 = vpop.f32.mrb[0].mxu0
    %v118 = vadd.f32 %v65, %v117
    %v119 = vpop.f32.mrb[0].mxu0
    %120 = vdwg.mxu0
    %v121 = vmax.f32 %v115, 0.0
    %v122 = vmax.f32 %v118, 0.0
    %v123 = vpack.c.bf16 %v122, %v121
    %v124 = vld [vmem:[#allocation2] sm:$0xf]
    %v125 = vld [vmem:[#allocation2 + $0x4] sm:$0xf]
    %v126 = vld [vmem:[#allocation2 + $0x8] sm:$0xf]
    %v127 = vld [vmem:[#allocation2 + $0xc] sm:$0xf]
    %v128 = vld [vmem:[#allocation2 + $0x10] sm:$0xf]
    %v129 = vld [vmem:[#allocation2 + $0x14] sm:$0xf]
    %v130 = vld [vmem:[#allocation2 + $0x18] sm:$0xf]
    %v131 = vld [vmem:[#allocation2 + $0x1c] sm:$0xf]
    %v132 = vld [vmem:[#allocation2 + $0x20] sm:$0xf]
    %v133 = vld [vmem:[#allocation2 + $0x24] sm:$0xf]
    %v134 = vld [vmem:[#allocation2 + $0x28] sm:$0xf]
    %v135 = vld [vmem:[#allocation2 + $0x2c] sm:$0xf]
    %v136 = vld [vmem:[#allocation2 + $0x30] sm:$0xf]
    %v137 = vld [vmem:[#allocation2 + $0x34] sm:$0xf]
    %v138 = vld [vmem:[#allocation2 + $0x38] sm:$0xf]
    %v139 = vld [vmem:[#allocation2 + $0x3c] sm:$0xf]
    %v140 = vld [vmem:[%s4] sm:$0x1]
    %v142 = vlaneseq
    %v143 = vshrl.u32 %v142, 7
    %v144 = vsub.s32 0, %v143
    %v145 = vrot.slane %v140, %v144
    %v163 = vunpack.c.l.b16 %v124
    %v164 = vunpack.c.l.b16 %v125
    %v165 = vunpack.c.l.b16 %v126
    %v166 = vunpack.c.l.b16 %v127
    %v167 = vunpack.c.l.b16 %v128
    %v168 = vunpack.c.l.b16 %v129
    %v169 = vunpack.c.l.b16 %v130
    %v170 = vunpack.c.l.b16 %v131
    %v171 = vunpack.c.l.b16 %v132
    %v172 = vunpack.c.l.b16 %v133
    %v173 = vunpack.c.l.b16 %v134
    %v174 = vunpack.c.l.b16 %v135
    %v175 = vunpack.c.l.b16 %v136
    %v176 = vunpack.c.l.b16 %v137
    %v177 = vunpack.c.l.b16 %v138
    %v178 = vunpack.c.l.b16 %v139
    %v179 = vpack.c.b16 %v164, %v163
    %v180 = vpack.c.b16 %v166, %v165
    %v181 = vpack.c.b16 %v168, %v167
    %v182 = vpack.c.b16 %v170, %v169
    %v183 = vpack.c.b16 %v172, %v171
    %v184 = vpack.c.b16 %v174, %v173
    %v185 = vpack.c.b16 %v176, %v175
    %v186 = vpack.c.b16 %v178, %v177
    %195 = vmatprep.subr.bf16.mxu0 0
    %196 = vmatpush1.bf16.msra.mxu0 %v179
    %197 = vmatprep.subr.bf16.mxu0 0
    %198 = vmatpush1.bf16.msra.mxu0 %v180
    %199 = vmatprep.subr.bf16.mxu0 0
    %200 = vmatpush1.bf16.msra.mxu0 %v181
    %201 = vmatprep.subr.bf16.mxu0 0
    %202 = vmatpush1.bf16.msra.mxu0 %v182
    %203 = vmatprep.subr.bf16.mxu0 0
    %204 = vmatpush1.bf16.msra.mxu0 %v183
    %205 = vmatprep.subr.bf16.mxu0 0
    %206 = vmatpush1.bf16.msra.mxu0 %v184
    %207 = vmatprep.subr.bf16.mxu0 0
    %208 = vmatpush1.bf16.msra.mxu0 %v185
    %209 = vmatprep.subr.bf16.mxu0 0
    %210 = vmatpush1.bf16.msra.mxu0 %v186
    %211 = vmatprep.subr.bf16.mxu0 0
    %212 = vmatpush1.bf16.msra.mxu0 0
    %213 = vmatprep.subr.bf16.mxu0 0
    %214 = vmatpush1.bf16.msra.mxu0 0
    %215 = vmatprep.subr.bf16.mxu0 0
    %216 = vmatpush1.bf16.msra.mxu0 0
    %217 = vmatprep.subr.bf16.mxu0 0
    %218 = vmatpush1.bf16.msra.mxu0 0
    %219 = vmatprep.subr.bf16.mxu0 0
    %220 = vmatpush1.bf16.msra.mxu0 0
    %221 = vmatprep.subr.bf16.mxu0 0
    %222 = vmatpush1.bf16.msra.mxu0 0
    %223 = vmatprep.subr.bf16.mxu0 0
    %224 = vmatpush1.bf16.msra.mxu0 0
    %225 = vmatprep.subr.bf16.mxu0 0
    %226 = vmatpush1.bf16.msra.mxu0 0
    %227 = vmatprep.mubr.bf16.mxu0 0
    %228 = vmatmul.mubr.bf16.gmra.mrb[0].mxu0 %v123
    %v229 = vpop.f32.mrb[0].mxu0
    %v230 = vadd.f32 %v145, %v229
    %v231 = vpop.f32.mrb[0].mxu0
    %v232 = vpop.f32.mrb[0].mxu0
    %v233 = vadd.f32 %v145, %v232
    %v234 = vpop.f32.mrb[0].mxu0
    %235 = vdwg.mxu0
    %v236 = vmax.f32 %v230, 0.0
    %v237 = vmax.f32 %v233, 0.0
    %v238 = vpack.c.bf16 %v237, %v236
    %v239 = vld [vmem:[#allocation4] sm:$0xf]
    %v240 = vld [vmem:[#allocation4 + $0x4] sm:$0xf]
    %v241 = vld [vmem:[#allocation4 + $0x8] sm:$0xf]
    %v242 = vld [vmem:[#allocation4 + $0xc] sm:$0xf]
    %v243 = vld [vmem:[#allocation4 + $0x10] sm:$0xf]
    %v244 = vld [vmem:[#allocation4 + $0x14] sm:$0xf]
    %v245 = vld [vmem:[#allocation4 + $0x18] sm:$0xf]
    %v246 = vld [vmem:[#allocation4 + $0x1c] sm:$0xf]
    %v247 = vld [vmem:[#allocation4 + $0x20] sm:$0xf]
    %v248 = vld [vmem:[#allocation4 + $0x24] sm:$0xf]
    %v249 = vld [vmem:[#allocation4 + $0x28] sm:$0xf]
    %v250 = vld [vmem:[#allocation4 + $0x2c] sm:$0xf]
    %v251 = vld [vmem:[#allocation4 + $0x30] sm:$0xf]
    %v252 = vld [vmem:[#allocation4 + $0x34] sm:$0xf]
    %v253 = vld [vmem:[#allocation4 + $0x38] sm:$0xf]
    %v254 = vld [vmem:[#allocation4 + $0x3c] sm:$0xf]
    %v255 = vld [vmem:[%s6] sm:$0x1]
    %v257 = vlaneseq
    %v258 = vshrl.u32 %v257, 7
    %v259 = vsub.s32 0, %v258
    %v260 = vrot.slane %v255, %v259
    %v278 = vunpack.c.l.b16 %v239
    %v279 = vunpack.c.l.b16 %v240
    %v280 = vunpack.c.l.b16 %v241
    %v281 = vunpack.c.l.b16 %v242
    %v282 = vunpack.c.l.b16 %v243
    %v283 = vunpack.c.l.b16 %v244
    %v284 = vunpack.c.l.b16 %v245
    %v285 = vunpack.c.l.b16 %v246
    %v286 = vunpack.c.l.b16 %v247
    %v287 = vunpack.c.l.b16 %v248
    %v288 = vunpack.c.l.b16 %v249
    %v289 = vunpack.c.l.b16 %v250
    %v290 = vunpack.c.l.b16 %v251
    %v291 = vunpack.c.l.b16 %v252
    %v292 = vunpack.c.l.b16 %v253
    %v293 = vunpack.c.l.b16 %v254
    %v294 = vpack.c.b16 %v279, %v278
    %v295 = vpack.c.b16 %v281, %v280
    %v296 = vpack.c.b16 %v283, %v282
    %v297 = vpack.c.b16 %v285, %v284
    %v298 = vpack.c.b16 %v287, %v286
    %v299 = vpack.c.b16 %v289, %v288
    %v300 = vpack.c.b16 %v291, %v290
    %v301 = vpack.c.b16 %v293, %v292
    %310 = vmatprep.subr.bf16.mxu0 0
    %311 = vmatpush1.bf16.msra.mxu0 %v294
    %312 = vmatprep.subr.bf16.mxu0 0
    %313 = vmatpush1.bf16.msra.mxu0 %v295
    %314 = vmatprep.subr.bf16.mxu0 0
    %315 = vmatpush1.bf16.msra.mxu0 %v296
    %316 = vmatprep.subr.bf16.mxu0 0
    %317 = vmatpush1.bf16.msra.mxu0 %v297
    %318 = vmatprep.subr.bf16.mxu0 0
    %319 = vmatpush1.bf16.msra.mxu0 %v298
    %320 = vmatprep.subr.bf16.mxu0 0
    %321 = vmatpush1.bf16.msra.mxu0 %v299
    %322 = vmatprep.subr.bf16.mxu0 0
    %323 = vmatpush1.bf16.msra.mxu0 %v300
    %324 = vmatprep.subr.bf16.mxu0 0
    %325 = vmatpush1.bf16.msra.mxu0 %v301
    %326 = vmatprep.subr.bf16.mxu0 0
    %327 = vmatpush1.bf16.msra.mxu0 0
    %328 = vmatprep.subr.bf16.mxu0 0
    %329 = vmatpush1.bf16.msra.mxu0 0
    %330 = vmatprep.subr.bf16.mxu0 0
    %331 = vmatpush1.bf16.msra.mxu0 0
    %332 = vmatprep.subr.bf16.mxu0 0
    %333 = vmatpush1.bf16.msra.mxu0 0
    %334 = vmatprep.subr.bf16.mxu0 0
    %335 = vmatpush1.bf16.msra.mxu0 0
    %336 = vmatprep.subr.bf16.mxu0 0
    %337 = vmatpush1.bf16.msra.mxu0 0
    %338 = vmatprep.subr.bf16.mxu0 0
    %339 = vmatpush1.bf16.msra.mxu0 0
    %340 = vmatprep.subr.bf16.mxu0 0
    %341 = vmatpush1.bf16.msra.mxu0 0
    %342 = vmatprep.mubr.bf16.mxu0 0
    %343 = vmatmul.mubr.bf16.gmra.mrb[0].mxu0 %v238
    %v344 = vpop.f32.mrb[0].mxu0
    %v345 = vadd.f32 %v260, %v344
    %v346 = vpop.f32.mrb[0].mxu0
    %v347 = vpop.f32.mrb[0].mxu0
    %v348 = vadd.f32 %v260, %v347
    %v349 = vpop.f32.mrb[0].mxu0
    %350 = vdwg.mxu0
    %v351 = vpack.c.bf16 %v348, %v345
    %v353 = vunpack.c.l.b16 %v351
    %v354 = vunpack.c.h.b16 %v351
    %v355 = vpack.c.b16 %v353, %v353
    %v356 = vpack.c.b16 %v354, %v354
    %359 = vst [vmem:[%s7] sm:$0xf] %v355
    %360 = vst [vmem:[%s7 + $0x4] sm:$0xf] %v356
    %v361 = vlaneseq
    %v362 = vand.u32 %v361, 127
    %vm363 = vcmp.lt.s32.totalorder %v362, 2
    %v364 = vsel %vm363, %v345, -inf
    %v365 = vsel %vm363, %v348, -inf
    %366 = vmax.xlane.f32.xlu0 %v364
    %v367 = vpop.xlane.xlu0 %366
    %368 = vmax.xlane.f32.xlu0 %v365
    %v369 = vpop.xlane.xlu0 %368
    %vm370 = vcmp.eq.f32.partialorder %v364, %v367
    %vm371 = vcmp.eq.f32.partialorder %v365, %v369
    %vm372 = vmand %vm370, %vm363
    %vm373 = vmand %vm371, %vm363
    %v374 = vsel %vm372, %v362, 128
    %v375 = vsel %vm373, %v362, 128
    %v376 = vand.u32 %v374, 65535
    %v377 = vshra.s32 %v374, 16
    %v378 = vcvt.s32.f32 %v376
    %v379 = vcvt.s32.f32 %v377
    %380 = vmin.xlane.f32.xlu0 %v379
    %v381 = vpop.xlane.xlu0 %380
    %vm382 = vcmp.eq.f32.partialorder %v379, %v381
    %v383 = vsel %vm382, %v378, inf
    %384 = vmin.xlane.f32.xlu0 %v383
    %v385 = vpop.xlane.xlu0 %384
    %v386 = vcvt.f32.s32 %v385
    %v387 = vcvt.f32.s32 %v381
    %v388 = vshll.u32 %v387, 16
    %v389 = vadd.s32 %v388, %v386
    %v390 = vand.u32 %v375, 65535
    %v391 = vshra.s32 %v375, 16
    %v392 = vcvt.s32.f32 %v390
    %v393 = vcvt.s32.f32 %v391
    %394 = vmin.xlane.f32.xlu0 %v393
    %v395 = vpop.xlane.xlu0 %394
    %vm396 = vcmp.eq.f32.partialorder %v393, %v395
    %v397 = vsel %vm396, %v392, inf
    %398 = vmin.xlane.f32.xlu0 %v397
    %v399 = vpop.xlane.xlu0 %398
    %v400 = vcvt.f32.s32 %v399
    %v401 = vcvt.f32.s32 %v395
    %v402 = vshll.u32 %v401, 16
    %v403 = vadd.s32 %v402, %v400
    %vm404 = vcmask 7168
    %405 = vst.msk [vmem:[%s8] sm:$0xff] %vm404, %v389
    %406 = vst.msk [vmem:[%s8 + $0x8] sm:$0xff] %vm404, %v403
    // Predicated region
    $region38: #{_dqn_forward_impl.1} parent=1 // pred_check
      _
    $region39: #{_dqn_forward_impl.1} parent=1 // pred_check_branch
      %408 = sbr.rel (0) target = $region41
    $region40: #{_dqn_forward_impl.1} parent=1 // pred_region
      _
    $region41: #{_dqn_forward_impl.1} parent=1 // pred_fallthru
      _
    // Predicated region
    $region42: #{_dqn_forward_impl.1} parent=1 // pred_check
      _
    $region43: #{_dqn_forward_impl.1} parent=1 // pred_check_branch
      %410 = sbr.rel (0) target = $region45
    $region44: #{_dqn_forward_impl.1} parent=1 // pred_region
      _
    $region45: #{_dqn_forward_impl.1} parent=1 // pred_fallthru
      _
    // Predicated region
    $region46: #{_dqn_forward_impl.1} parent=1 // pred_check
      _
    $region47: #{_dqn_forward_impl.1} parent=1 // pred_check_branch
      %412 = sbr.rel (0) target = $region49
    $region48: #{_dqn_forward_impl.1} parent=1 // pred_region
      _
    $region49: #{_dqn_forward_impl.1} parent=1 // pred_fallthru
      _
    // Predicated region
    $region50: #{_dqn_forward_impl.1} parent=1 // pred_check
      _
    $region51: #{_dqn_forward_impl.1} parent=1 // pred_check_branch
      %414 = sbr.rel (0) target = $region53
    $region52: #{_dqn_forward_impl.1} parent=1 // pred_region
      _
    $region53: #{_dqn_forward_impl.1} parent=1 // pred_fallthru
      _
    %415 = vsyncpa [#allocation3], 1
    %416 = vsyncpa [#allocation5], 1

</llo_original>
